<compile_context>
chip_gen: v6e
topology: v6e:2x2x1
jax: 0.10.0
libtpu: 0.0.40
codegen_flags: <defaults>
</compile_context>

<pallas_src>
import math

import jax
import jax.numpy as jnp
from jax.experimental import pallas as pl
from jax.experimental.pallas import tpu as pltpu

_EPS = 1e-5


# ---------------------------------------------------------------------------
# Tiling / VMEM helpers
# ---------------------------------------------------------------------------
def _divisor_tile(n, target, multiple=8):
    """Largest divisor of n that is <= target and a multiple of `multiple`
    (or n itself), so block shapes satisfy the (8, 128) layout rule."""
    for cand in range(min(target, n), 0, -1):
        if n % cand == 0 and (cand % multiple == 0 or cand == n):
            return cand
    return n


def _divisor(n, target):
    for cand in range(min(target, n), 0, -1):
        if n % cand == 0:
            return cand
    return n


def _vmem_limit(resident_bytes, streamed_tile_bytes):
    # weights + 2x streamed activation tiles, ~15% headroom; clamp to a range
    # that is above the scoped defaults and within physical VMEM on v5e/v6e/v7x.
    est = int((resident_bytes + 2 * streamed_tile_bytes) * 1.15)
    return int(min(max(est, 32 * 1024 * 1024), 64 * 1024 * 1024))


# ---------------------------------------------------------------------------
# Kernel 1: LayerNorm1 + fused QKV projection (row-tiled)
# ---------------------------------------------------------------------------
def _ln_qkv_kernel(x_ref, g1_ref, b1_ref, wqkv_ref, bqkv_ref, qkv_ref):
    x = x_ref[...]                                           # (TR, E)
    mu = jnp.mean(x, axis=-1, keepdims=True)
    var = jnp.mean((x - mu) ** 2, axis=-1, keepdims=True)
    ln = (x - mu) * jax.lax.rsqrt(var + _EPS) * g1_ref[...] + b1_ref[...]
    qkv = jnp.dot(ln, wqkv_ref[...], preferred_element_type=jnp.float32) + bqkv_ref[...]
    qkv_ref[...] = qkv.astype(qkv_ref.dtype)                 # (TR, 3E); q already scaled


# ---------------------------------------------------------------------------
# Kernel 2: flash-style attention (online softmax over KV tiles)
# ---------------------------------------------------------------------------
def _flash_attn_kernel(q_ref, k_ref, v_ref, o_ref, m_sc, l_sc, acc_sc):
    ki = pl.program_id(2)

    @pl.when(ki == 0)
    def _():
        m_sc[...] = jnp.full(m_sc.shape, -jnp.inf, m_sc.dtype)
        l_sc[...] = jnp.zeros(l_sc.shape, l_sc.dtype)
        acc_sc[...] = jnp.zeros(acc_sc.shape, acc_sc.dtype)

    # q_ref: (G, TQ, Dh), k_ref/v_ref: (G, TK, Dh); head-group is the batch dim.
    s = jnp.einsum("gqd,gkd->gqk", q_ref[...], k_ref[...],
                   preferred_element_type=jnp.float32)
    m_prev = m_sc[...]
    m_new = jnp.maximum(m_prev, jnp.max(s, axis=-1, keepdims=True))
    alpha = jnp.exp(m_prev - m_new)
    p = jnp.exp(s - m_new)
    l_sc[...] = alpha * l_sc[...] + jnp.sum(p, axis=-1, keepdims=True)
    acc_sc[...] = alpha * acc_sc[...] + jnp.einsum(
        "gqk,gkd->gqd", p.astype(v_ref.dtype), v_ref[...],
        preferred_element_type=jnp.float32)
    m_sc[...] = m_new

    @pl.when(ki == pl.num_programs(2) - 1)
    def _():
        inv_l = 1.0 / l_sc[...]            # one exact divide per row (keeps parity)
        o_ref[...] = (acc_sc[...] * inv_l).astype(o_ref.dtype)


# ---------------------------------------------------------------------------
# Kernel 3: out-proj + residual + LayerNorm2 + MLP + residual (row-tiled)
# ---------------------------------------------------------------------------
def _out_mlp_kernel(x_ref, ctx_ref, wo_ref, bo_ref, g2_ref, b2_ref,
                    w1_ref, bi1_ref, w2_ref, bi2_ref, o_ref):
    attn = jnp.dot(ctx_ref[...], wo_ref[...], preferred_element_type=jnp.float32) + bo_ref[...]
    x1 = x_ref[...] + attn                                   # residual 1

    mu = jnp.mean(x1, axis=-1, keepdims=True)
    var = jnp.mean((x1 - mu) ** 2, axis=-1, keepdims=True)
    ln2 = (x1 - mu) * jax.lax.rsqrt(var + _EPS) * g2_ref[...] + b2_ref[...]

    h1 = jnp.dot(ln2, w1_ref[...], preferred_element_type=jnp.float32) + bi1_ref[...]
    h1 = jax.nn.gelu(h1, approximate=False)                  # matches nn.GELU()
    h2 = jnp.dot(h1, w2_ref[...], preferred_element_type=jnp.float32) + bi2_ref[...]

    o_ref[...] = (x1 + h2).astype(o_ref.dtype)               # residual 2 (dropout p=0)


# ---------------------------------------------------------------------------
# One-time parameter preparation (out of the per-call hot path)
# ---------------------------------------------------------------------------
def prepare_block_params(params, num_heads):
    E = params["g1"].shape[0]
    H = params["bi1"].shape[0]
    Dh = E // num_heads
    dt = params["wqkv"].dtype

    # Fold 1/sqrt(Dh) into the Q columns of the in_proj weight/bias (exact in math;
    # only reassociates roundings -- well inside 1e-4 parity).
    scale = 1.0 / math.sqrt(Dh)
    col_scale = jnp.concatenate([jnp.full((E,), scale, dt), jnp.ones((2 * E,), dt)])

    return dict(
        g1=params["g1"].reshape(1, E),
        be1=params["be1"].reshape(1, E),
        wqkv_t=jnp.transpose(params["wqkv"]) * col_scale[None, :],   # (E, 3E)
        bqkv=(params["bqkv"] * col_scale).reshape(1, 3 * E),
        wo_t=jnp.transpose(params["wo"]),                            # (E, E)
        bo=params["bo"].reshape(1, E),
        g2=params["g2"].reshape(1, E),
        be2=params["be2"].reshape(1, E),
        w1_t=jnp.transpose(params["w1"]),                            # (E, H)
        bi1=params["bi1"].reshape(1, H),
        w2_t=jnp.transpose(params["w2"]),                            # (H, E)
        bi2=params["bi2"].reshape(1, E),
    )


# ---------------------------------------------------------------------------
# Wrapper
# ---------------------------------------------------------------------------
def attention_block(x_sbe, prep, num_heads, *, row_tile=256, q_tile=256, kv_tile=256):
    S, B, E = x_sbe.shape
    NH = num_heads
    Dh = E // NH
    H = prep["bi1"].shape[1]
    R = S * B
    BH = B * NH
    dtype = x_sbe.dtype
    isz = jnp.dtype(dtype).itemsize

    TR = _divisor_tile(R, row_tile)       # row tile of the flattened (S*B) axis
    TQ = _divisor_tile(S, q_tile)         # query tile
    TK = _divisor_tile(S, kv_tile)        # key/value tile
    G = _divisor(BH, 8)                   # (batch*heads) per flash block

    x2d = x_sbe.reshape(R, E)             # free: rows ordered (s, b)

    # ---- Phase 1: LN1 + fused QKV -------------------------------------------
    w1_res = isz * (E * 3 * E + 3 * E + 2 * E)
    qkv = pl.pallas_call(
        _ln_qkv_kernel,
        out_shape=jax.ShapeDtypeStruct((R, 3 * E), dtype),
        grid=(R // TR,),
        in_specs=[
            pl.BlockSpec((TR, E), lambda i: (i, 0)),
            pl.BlockSpec((1, E), lambda i: (0, 0)),        # constant index_map:
            pl.BlockSpec((1, E), lambda i: (0, 0)),        # weights stay VMEM-resident
            pl.BlockSpec((E, 3 * E), lambda i: (0, 0)),
            pl.BlockSpec((1, 3 * E), lambda i: (0, 0)),
        ],
        out_specs=pl.BlockSpec((TR, 3 * E), lambda i: (i, 0)),
        compiler_params=pltpu.CompilerParams(
            dimension_semantics=("parallel",),
            vmem_limit_bytes=_vmem_limit(w1_res, TR * 4 * E * isz),
        ),
        cost_estimate=pl.CostEstimate(
            flops=2 * R * E * 3 * E,
            transcendentals=R,
            bytes_accessed=isz * R * 4 * E + w1_res,
        ),
    )(x2d, prep["g1"], prep["be1"], prep["wqkv_t"], prep["bqkv"])

    # ---- Wrapper-side head layout (HBM layout plumbing, not in-kernel XLU) ---
    # TODO(synk): emit q/k/v directly in (B*NH, S, Dh) layout from phase 1 to save
    #             these two HBM passes at very large shapes.
    qkv_h = jnp.transpose(qkv.reshape(S, B, 3, NH, Dh), (2, 1, 3, 0, 4))
    qkv_h = qkv_h.reshape(3, BH, S, Dh)
    qh, kh, vh = qkv_h[0], qkv_h[1], qkv_h[2]

    # ---- Phase 2: flash attention -------------------------------------------
    ctx = pl.pallas_call(
        _flash_attn_kernel,
        out_shape=jax.ShapeDtypeStruct((BH, S, Dh), dtype),
        grid=(BH // G, S // TQ, S // TK),
        in_specs=[
            pl.BlockSpec((G, TQ, Dh), lambda g, qi, ki: (g, qi, 0)),
            pl.BlockSpec((G, TK, Dh), lambda g, qi, ki: (g, ki, 0)),
            pl.BlockSpec((G, TK, Dh), lambda g, qi, ki: (g, ki, 0)),
        ],
        out_specs=pl.BlockSpec((G, TQ, Dh), lambda g, qi, ki: (g, qi, 0)),
        scratch_shapes=[
            pltpu.VMEM((G, TQ, 1), jnp.float32),    # running max
            pltpu.VMEM((G, TQ, 1), jnp.float32),    # running sum
            pltpu.VMEM((G, TQ, Dh), jnp.float32),   # output accumulator
        ],
        compiler_params=pltpu.CompilerParams(
            dimension_semantics=("parallel", "parallel", "arbitrary"),
            vmem_limit_bytes=_vmem_limit(0, G * (2 * TQ + 2 * TK) * Dh * isz),
        ),
        cost_estimate=pl.CostEstimate(
            flops=4 * BH * S * S * Dh,
            transcendentals=BH * S * S,
            bytes_accessed=isz * 4 * BH * S * Dh,
        ),
    )(qh, kh, vh)

    # Back to (S*B, E) row order for the dense tail.
    ctx2d = jnp.transpose(ctx.reshape(B, NH, S, Dh), (2, 0, 1, 3)).reshape(R, E)

    # ---- Phase 3: out-proj + residual + LN2 + MLP + residual -----------------
    w3_res = isz * (E * E + 2 * E * H + 3 * E + H + 2 * E)
    out2d = pl.pallas_call(
        _out_mlp_kernel,
        out_shape=jax.ShapeDtypeStruct((R, E), dtype),
        grid=(R // TR,),
        in_specs=[
            pl.BlockSpec((TR, E), lambda i: (i, 0)),       # x (residual input)
            pl.BlockSpec((TR, E), lambda i: (i, 0)),       # attention context
            pl.BlockSpec((E, E), lambda i: (0, 0)),        # wo_t    (resident)
            pl.BlockSpec((1, E), lambda i: (0, 0)),        # bo
            pl.BlockSpec((1, E), lambda i: (0, 0)),        # gamma2
            pl.BlockSpec((1, E), lambda i: (0, 0)),        # beta2
            pl.BlockSpec((E, H), lambda i: (0, 0)),        # w1_t    (resident)
            pl.BlockSpec((1, H), lambda i: (0, 0)),        # bi1
            pl.BlockSpec((H, E), lambda i: (0, 0)),        # w2_t    (resident)
            pl.BlockSpec((1, E), lambda i: (0, 0)),        # bi2
        ],
        out_specs=pl.BlockSpec((TR, E), lambda i: (i, 0)),
        compiler_params=pltpu.CompilerParams(
            dimension_semantics=("parallel",),
            vmem_limit_bytes=_vmem_limit(w3_res, TR * (3 * E + H) * isz),
        ),
        cost_estimate=pl.CostEstimate(
            flops=2 * R * E * E + 4 * R * E * H,
            transcendentals=R * H + R,
            bytes_accessed=isz * 3 * R * E + w3_res,
        ),
    )(x2d, ctx2d, prep["wo_t"], prep["bo"], prep["g2"], prep["be2"],
      prep["w1_t"], prep["bi1"], prep["w2_t"], prep["bi2"])

    return out2d.reshape(S, B, E)


# ---------------------------------------------------------------------------
# Pure-JAX reference (mirrors PyTorch semantics) for a correctness check
# ---------------------------------------------------------------------------
def attention_block_ref(x, p, num_heads):
    S, B, E = x.shape
    Dh = E // num_heads

    def ln(t, g, b):
        mu = t.mean(-1, keepdims=True)
        var = ((t - mu) ** 2).mean(-1, keepdims=True)
        return (t - mu) / jnp.sqrt(var + 1e-5) * g + b

    inp = ln(x, p["g1"], p["be1"])
    qkv = inp @ p["wqkv"].T + p["bqkv"]
    q, k, v = jnp.split(qkv, 3, axis=-1)

    def heads(t):
        return t.reshape(S, B, num_heads, Dh).transpose(1, 2, 0, 3)

    qh, kh, vh = heads(q), heads(k), heads(v)
    sc = jnp.einsum("bhqd,bhkd->bhqk", qh, kh) / jnp.sqrt(Dh)
    pr = jax.nn.softmax(sc, axis=-1)
    o = jnp.einsum("bhqk,bhkd->bhqd", pr, vh)
    o = o.transpose(2, 0, 1, 3).reshape(S, B, E)
    o = o @ p["wo"].T + p["bo"]
    x = x + o
    l2 = ln(x, p["g2"], p["be2"])
    h = jax.nn.gelu(l2 @ p["w1"].T + p["bi1"], approximate=False)
    h = h @ p["w2"].T + p["bi2"]
    return x + h


if __name__ == "__main__":
    # Small shapes consistent with the module:
    S, B, E, H, NH = 8, 2, 32, 64, 4   # seq, batch, embed_dim, hidden_dim, num_heads

    key = jax.random.PRNGKey(0)
    ks = jax.random.split(key, 13)
    f32 = jnp.float32

    params = {
        "g1":   1.0 + 0.05 * jax.random.normal(ks[0], (E,), f32),
        "be1":  0.05 * jax.random.normal(ks[1], (E,), f32),
        "wqkv": 0.05 * jax.random.normal(ks[2], (3 * E, E), f32),
        "bqkv": 0.05 * jax.random.normal(ks[3], (3 * E,), f32),
        "wo":   0.05 * jax.random.normal(ks[4], (E, E), f32),
        "bo":   0.05 * jax.random.normal(ks[5], (E,), f32),
        "g2":   1.0 + 0.05 * jax.random.normal(ks[6], (E,), f32),
        "be2":  0.05 * jax.random.normal(ks[7], (E,), f32),
        "w1":   0.05 * jax.random.normal(ks[8], (H, E), f32),
        "bi1":  0.05 * jax.random.normal(ks[9], (H,), f32),
        "w2":   0.05 * jax.random.normal(ks[10], (E, H), f32),
        "bi2":  0.05 * jax.random.normal(ks[11], (E,), f32),
    }
    x = jax.random.normal(ks[12], (S, B, E), f32)

    prepared = prepare_block_params(params, NH)   # done once, outside the hot path

    out = attention_block(x, prepared, NH)
    out = jax.block_until_ready(out)

    ref = attention_block_ref(x, params, NH)
    assert out.shape == (S, B, E)
    assert jnp.allclose(out, ref, atol=1e-4, rtol=1e-4), \
        f"max abs err {jnp.max(jnp.abs(out - ref))}"

    print("KERNEL_OK")
</pallas_src>

<mosaic_0001>
module attributes {stable_mosaic.version = 11 : i64} {
  func.func @_ln_qkv_kernel(%arg0: i32, %arg1: memref<16x32xf32, #tpu.memory_space<vmem>>, %arg2: memref<1x32xf32, #tpu.memory_space<vmem>>, %arg3: memref<1x32xf32, #tpu.memory_space<vmem>>, %arg4: memref<32x96xf32, #tpu.memory_space<vmem>>, %arg5: memref<1x96xf32, #tpu.memory_space<vmem>>, %arg6: memref<16x96xf32, #tpu.memory_space<vmem>>) attributes {dimension_semantics = [#tpu.dimension_semantics<parallel>], iteration_bounds = array<i64: 1>, scalar_prefetch = 0 : i64, scratch_operands = 0 : i64, tpu.core_type = #tpu.core_type<tc>, window_params = [{transform_indices = @transform_0, window_bounds = array<i64: 16, 32>}, {pipeline_mode = #tpu.pipeline_mode<synchronous>, transform_indices = @transform_1, window_bounds = array<i64: 1, 32>}, {pipeline_mode = #tpu.pipeline_mode<synchronous>, transform_indices = @transform_2, window_bounds = array<i64: 1, 32>}, {pipeline_mode = #tpu.pipeline_mode<synchronous>, transform_indices = @transform_3, window_bounds = array<i64: 32, 96>}, {pipeline_mode = #tpu.pipeline_mode<synchronous>, transform_indices = @transform_4, window_bounds = array<i64: 1, 96>}, {transform_indices = @transform_5, window_bounds = array<i64: 16, 96>}]} {
    %c0 = arith.constant 0 : index
    %c0_0 = arith.constant 0 : index
    %0 = vector.load %arg1[%c0, %c0_0] : memref<16x32xf32, #tpu.memory_space<vmem>>, vector<16x32xf32>
    %cst = arith.constant dense<0.000000e+00> : vector<16xf32>
    %1 = vector.multi_reduction <add>, %0, %cst [1] : vector<16x32xf32> to vector<16xf32>
    %2 = vector.shape_cast %1 : vector<16xf32> to vector<16x1xf32>
    %cst_1 = arith.constant 3.200000e+01 : f32
    %3 = vector.broadcast %cst_1 : f32 to vector<16x1xf32>
    %4 = arith.divf %2, %3 : vector<16x1xf32>
    %5 = vector.broadcast %4 : vector<16x1xf32> to vector<16x32xf32>
    %6 = arith.subf %0, %5 : vector<16x32xf32>
    %7 = arith.mulf %6, %6 : vector<16x32xf32>
    %cst_2 = arith.constant dense<0.000000e+00> : vector<16xf32>
    %8 = vector.multi_reduction <add>, %7, %cst_2 [1] : vector<16x32xf32> to vector<16xf32>
    %9 = vector.shape_cast %8 : vector<16xf32> to vector<16x1xf32>
    %cst_3 = arith.constant 3.200000e+01 : f32
    %10 = vector.broadcast %cst_3 : f32 to vector<16x1xf32>
    %11 = arith.divf %9, %10 : vector<16x1xf32>
    %12 = vector.broadcast %4 : vector<16x1xf32> to vector<16x32xf32>
    %13 = arith.subf %0, %12 : vector<16x32xf32>
    %cst_4 = arith.constant 9.99999974E-6 : f32
    %14 = vector.broadcast %cst_4 : f32 to vector<16x1xf32>
    %15 = arith.addf %11, %14 : vector<16x1xf32>
    %16 = math.rsqrt %15 : vector<16x1xf32>
    %17 = vector.broadcast %16 : vector<16x1xf32> to vector<16x32xf32>
    %18 = arith.mulf %13, %17 : vector<16x32xf32>
    %c0_5 = arith.constant 0 : index
    %c0_6 = arith.constant 0 : index
    %19 = vector.load %arg2[%c0_5, %c0_6] : memref<1x32xf32, #tpu.memory_space<vmem>>, vector<1x32xf32>
    %20 = vector.broadcast %19 : vector<1x32xf32> to vector<16x32xf32>
    %21 = arith.mulf %18, %20 : vector<16x32xf32>
    %c0_7 = arith.constant 0 : index
    %c0_8 = arith.constant 0 : index
    %22 = vector.load %arg3[%c0_7, %c0_8] : memref<1x32xf32, #tpu.memory_space<vmem>>, vector<1x32xf32>
    %23 = vector.broadcast %22 : vector<1x32xf32> to vector<16x32xf32>
    %24 = arith.addf %21, %23 : vector<16x32xf32>
    %c0_9 = arith.constant 0 : index
    %c0_10 = arith.constant 0 : index
    %25 = vector.load %arg4[%c0_9, %c0_10] : memref<32x96xf32, #tpu.memory_space<vmem>>, vector<32x96xf32>
    %cst_11 = arith.constant dense<0.000000e+00> : vector<16x96xf32>
    %26 = tpu.matmul %24, %25, %cst_11 {dimension_numbers = #tpu.dot_dimension_numbers<[1], [0], [0], [1], [0, 0, 1, 1], [], []>} : vector<16x32xf32>, vector<32x96xf32>, vector<16x96xf32> -> vector<16x96xf32>
    %c0_12 = arith.constant 0 : index
    %c0_13 = arith.constant 0 : index
    %27 = vector.load %arg5[%c0_12, %c0_13] : memref<1x96xf32, #tpu.memory_space<vmem>>, vector<1x96xf32>
    %28 = vector.broadcast %27 : vector<1x96xf32> to vector<16x96xf32>
    %29 = arith.addf %26, %28 : vector<16x96xf32>
    %c0_14 = arith.constant 0 : index
    %c0_15 = arith.constant 0 : index
    %30 = vector.load %arg6[%c0_14, %c0_15] : memref<16x96xf32, #tpu.memory_space<vmem>>, vector<16x96xf32>
    tpu.vector_store %arg6[%c0_14, %c0_15], %29 {strides = array<i32>} : memref<16x96xf32, #tpu.memory_space<vmem>>, vector<16x96xf32>,
    return
  }
  func.func @transform_0(%arg0: i32) -> (i32, i32) {
    %c0_i32 = arith.constant 0 : i32
    %c0_i32_0 = arith.constant 0 : i32
    return %arg0, %c0_i32 : i32, i32
  }
  func.func @transform_1(%arg0: i32) -> (i32, i32) {
    %c0_i32 = arith.constant 0 : i32
    %c0_i32_0 = arith.constant 0 : i32
    %c0_i32_1 = arith.constant 0 : i32
    return %c0_i32, %c0_i32_0 : i32, i32
  }
  func.func @transform_2(%arg0: i32) -> (i32, i32) {
    %c0_i32 = arith.constant 0 : i32
    %c0_i32_0 = arith.constant 0 : i32
    %c0_i32_1 = arith.constant 0 : i32
    return %c0_i32, %c0_i32_0 : i32, i32
  }
  func.func @transform_3(%arg0: i32) -> (i32, i32) {
    %c0_i32 = arith.constant 0 : i32
    %c0_i32_0 = arith.constant 0 : i32
    %c0_i32_1 = arith.constant 0 : i32
    return %c0_i32, %c0_i32_0 : i32, i32
  }
  func.func @transform_4(%arg0: i32) -> (i32, i32) {
    %c0_i32 = arith.constant 0 : i32
    %c0_i32_0 = arith.constant 0 : i32
    %c0_i32_1 = arith.constant 0 : i32
    return %c0_i32, %c0_i32_0 : i32, i32
  }
  func.func @transform_5(%arg0: i32) -> (i32, i32) {
    %c0_i32 = arith.constant 0 : i32
    %c0_i32_0 = arith.constant 0 : i32
    return %arg0, %c0_i32 : i32, i32
  }
}

</mosaic_0001>

<llo_original>
// kernel: tpu_custom_call.1
$region0: #{tpu_custom_call.1}
  #allocation0 [shape = 'u32[]', space=smem, size = 0x4, offset = 0x4, fixed_abs, tag = 'smem constant byte address 0x4 - core index']
  #allocation1 [shape = 'u32[144,128]{1,0:T(1,128)}', space=vmem, size = 0x12000, scoped, tag = 'internal scratch']
  %s0 = inlined_call_operand.hbm [shape: f32[16,32], index: 0, kind: input, shape index: {}]
  %s1 = inlined_call_operand.vmem [shape: f32[1,32], index: 1, kind: input, shape index: {}]
  %s2 = inlined_call_operand.vmem [shape: f32[1,32], index: 2, kind: input, shape index: {}]
  %s3 = inlined_call_operand.hbm [shape: f32[32,96], index: 3, kind: input, shape index: {}]
  %s4 = inlined_call_operand.vmem [shape: f32[1,96], index: 4, kind: input, shape index: {}]
  %s5 = inlined_call_operand.hbm [shape: f32[16,96], index: 5, kind: output, shape index: {}]
  %s6 = sld [smem:[#allocation0]]
  $region38: #{tpu_custom_call.1} parent=0
    _
  %s8 = ssub.s32 1, %s6
  %s9 = scalar_select 0, %s8, %s6
  $region1: #{tpu_custom_call.1} parent=0
    #allocation2 [shape = 'u8[8192]{0}', space=vmem, size = 0x2000, scoped, tag = 'input window, operand 0, single buffered']
    #allocation3 [shape = 's32[1]{0}', space=sflag, size = 0x4, scoped, tag = 'scoped memory for tpu_custom_call.1']
    #allocation4 [shape = 's32[1]{0}', space=sflag, size = 0x4, scoped, tag = 'scoped memory for tpu_custom_call.1']
    #allocation5 [shape = 'u8[16384]{0}', space=vmem, size = 0x4000, scoped, tag = 'input window, operand 3, single buffered']
    #allocation6 [shape = 's32[1]{0}', space=sflag, size = 0x4, scoped, tag = 'scoped memory for tpu_custom_call.1']
    #allocation7 [shape = 'u8[8192]{0}', space=vmem, size = 0x2000, scoped, tag = 'output window, operand 0, single buffered']
    %10 = vsyncpa [#allocation3], 0
    %11 = vsyncpa [#allocation6], 0
    %12 = vsyncpa [#allocation4], 0
    // Predicated region
    $region2: #{tpu_custom_call.1} parent=1 // pred_check
      _
    $region3: #{tpu_custom_call.1} parent=1 // pred_check_branch
      %14 = sbr.rel (0) target = $region5
    $region4: #{tpu_custom_call.1} parent=1 // pred_region
      %s16 = ssub.s32 256, 256
      %17 = vsyncadd [#allocation3], %s16
      %s18 = sshll.u32 [#allocation2], 4
      %s19 = int_to_ptr.vmem [resolvable:$true] %s18
      %24 = dma.hbm_to_vmem [thread:$0]  %s0, 256, %s19, [#allocation3], 128, 128, 8
    $region5: #{tpu_custom_call.1} parent=1 // pred_fallthru
      _
    // Predicated region
    $region6: #{tpu_custom_call.1} parent=1 // pred_check
      _
    $region7: #{tpu_custom_call.1} parent=1 // pred_check_branch
      %26 = sbr.rel (0) target = $region9
    $region8: #{tpu_custom_call.1} parent=1 // pred_region
      _
    $region9: #{tpu_custom_call.1} parent=1 // pred_fallthru
      _
    // Predicated region
    $region10: #{tpu_custom_call.1} parent=1 // pred_check
      _
    $region11: #{tpu_custom_call.1} parent=1 // pred_check_branch
      %28 = sbr.rel (0) target = $region13
    $region12: #{tpu_custom_call.1} parent=1 // pred_region
      _
    $region13: #{tpu_custom_call.1} parent=1 // pred_fallthru
      _
    // Predicated region
    $region14: #{tpu_custom_call.1} parent=1 // pred_check
      _
    $region15: #{tpu_custom_call.1} parent=1 // pred_check_branch
      %30 = sbr.rel (0) target = $region17
    $region16: #{tpu_custom_call.1} parent=1 // pred_region
      %s32 = ssub.s32 512, 512
      %33 = vsyncadd [#allocation6], %s32
      %s34 = sshll.u32 [#allocation5], 4
      %s35 = int_to_ptr.vmem [resolvable:$true] %s34
      %40 = dma.hbm_to_vmem [thread:$0]  %s3, 512, %s35, [#allocation6], 128, 128, 8
    $region17: #{tpu_custom_call.1} parent=1 // pred_fallthru
      _
    // Predicated region
    $region18: #{tpu_custom_call.1} parent=1 // pred_check
      _
    $region19: #{tpu_custom_call.1} parent=1 // pred_check_branch
      %42 = sbr.rel (0) target = $region21
    $region20: #{tpu_custom_call.1} parent=1 // pred_region
      _
    $region21: #{tpu_custom_call.1} parent=1 // pred_fallthru
      _
    // Predicated region
    $region22: #{tpu_custom_call.1} parent=1 // pred_check
      _
    $region23: #{tpu_custom_call.1} parent=1 // pred_check_branch
      %44 = sbr.rel (0) target = $region25
    $region24: #{tpu_custom_call.1} parent=1 // pred_region
      %45 = dma.done [#allocation3], 256
    $region25: #{tpu_custom_call.1} parent=1 // pred_fallthru
      _
    // Predicated region
    $region26: #{tpu_custom_call.1} parent=1 // pred_check
      _
    $region27: #{tpu_custom_call.1} parent=1 // pred_check_branch
      %47 = sbr.rel (0) target = $region29
    $region28: #{tpu_custom_call.1} parent=1 // pred_region
      %48 = dma.done [#allocation6], 512
    $region29: #{tpu_custom_call.1} parent=1 // pred_fallthru
      _
    %v49 = vld [vmem:[#allocation2] sm:$0xff]
    %v50 = vld [vmem:[#allocation2 + $0x8] sm:$0xff]
    %vm51 = vcmask 261120
    %v52 = vsel %vm51, %v49, 0.0
    %53 = vadd.xlane.f32.xlu0 %v52
    %v54 = vpop.xlane.xlu0 %53
    %v55 = vsel %vm51, %v50, 0.0
    %56 = vadd.xlane.f32.xlu0 %v55
    %v57 = vpop.xlane.xlu0 %56
    %v58 = vrcp.pop 32.0
    %v59 = vmul.f32 %v54, %v58
    %v60 = vmul.f32 %v57, %v58
    %v61 = vsub.f32 %v49, %v59
    %v62 = vsub.f32 %v50, %v60
    %v63 = vmul.f32 %v61, %v61
    %v64 = vmul.f32 %v62, %v62
    %v65 = vsel %vm51, %v63, 0.0
    %66 = vadd.xlane.f32.xlu0 %v65
    %v67 = vpop.xlane.xlu0 %66
    %v68 = vsel %vm51, %v64, 0.0
    %69 = vadd.xlane.f32.xlu0 %v68
    %v70 = vpop.xlane.xlu0 %69
    %v71 = vmul.f32 %v67, %v58
    %v72 = vmul.f32 %v70, %v58
    %v73 = vadd.f32 %v71, 1e-05
    %v74 = vadd.f32 %v72, 1e-05
    %v75 = vrsqrt.pop %v73
    %v76 = vrsqrt.pop %v74
    %v77 = vmul.f32 %v61, %v75
    %v78 = vmul.f32 %v62, %v76
    %v79 = vld [vmem:[%s1] sm:$0x1]
    %v81 = vlaneseq
    %v82 = vshrl.u32 %v81, 7
    %v83 = vsub.s32 0, %v82
    %v84 = vrot.slane %v79, %v83
    %v86 = vmul.f32 %v77, %v84
    %v87 = vmul.f32 %v78, %v84
    %v88 = vld [vmem:[%s2] sm:$0x1]
    %v90 = vlaneseq
    %v91 = vshrl.u32 %v90, 7
    %v92 = vsub.s32 0, %v91
    %v93 = vrot.slane %v88, %v92
    %v95 = vadd.f32 %v86, %v93
    %v96 = vadd.f32 %v87, %v93
    %v97 = vld [vmem:[#allocation5] sm:$0xff]
    %v98 = vld [vmem:[#allocation5 + $0x8] sm:$0xff]
    %v99 = vld [vmem:[#allocation5 + $0x10] sm:$0xff]
    %v100 = vld [vmem:[#allocation5 + $0x18] sm:$0xff]
    %v101 = vld [vmem:[%s4] sm:$0x1]
    %v103 = vlaneseq
    %v104 = vshrl.u32 %v103, 7
    %v105 = vsub.s32 0, %v104
    %v106 = vrot.slane %v101, %v105
    %v109 = vsel %vm51, %v95, 0
    %v112 = vsel %vm51, %v96, 0
    %114 = vmatprep.subr.mxu0 0.0
    %115 = vmatpush1.msra.mxu0 0.0
    %116 = vmatprep.subr.mxu0 0.0
    %117 = vmatpush1.msra.mxu0 0.0
    %118 = vmatprep.subr.mxu0 0.0
    %119 = vmatpush1.msra.mxu0 0.0
    %120 = vmatprep.subr.mxu0 0.0
    %121 = vmatpush1.msra.mxu0 0.0
    %122 = vmatprep.subr.mxu0 0.0
    %123 = vmatpush1.msra.mxu0 0.0
    %124 = vmatprep.subr.mxu0 0.0
    %125 = vmatpush1.msra.mxu0 0.0
    %126 = vmatprep.subr.mxu0 0.0
    %127 = vmatpush1.msra.mxu0 0.0
    %128 = vmatprep.subr.mxu0 0.0
    %129 = vmatpush1.msra.mxu0 0.0
    %130 = vmatprep.subr.mxu0 0.0
    %131 = vmatpush1.msra.mxu0 0.0
    %132 = vmatprep.subr.mxu0 0.0
    %133 = vmatpush1.msra.mxu0 0.0
    %134 = vmatprep.subr.mxu0 0.0
    %135 = vmatpush1.msra.mxu0 0.0
    %136 = vmatprep.subr.mxu0 0.0
    %137 = vmatpush1.msra.mxu0 0.0
    %138 = vmatprep.subr.mxu0 0.0
    %139 = vmatpush1.msra.mxu0 %v100
    %140 = vmatprep.subr.mxu0 0.0
    %141 = vmatpush1.msra.mxu0 %v99
    %142 = vmatprep.subr.mxu0 0.0
    %143 = vmatpush1.msra.mxu0 %v98
    %144 = vmatprep.subr.mxu0 0.0
    %145 = vmatpush1.msra.mxu0 %v97
    %146 = vmatprep.subr.mxu0 0.0
    %147 = vmatpush2.msra.mxu0 0.0
    %148 = vmatprep.subr.mxu0 0.0
    %149 = vmatpush2.msra.mxu0 0.0
    %150 = vmatprep.subr.mxu0 0.0
    %151 = vmatpush2.msra.mxu0 0.0
    %152 = vmatprep.subr.mxu0 0.0
    %153 = vmatpush2.msra.mxu0 0.0
    %154 = vmatprep.subr.mxu0 0.0
    %155 = vmatpush2.msra.mxu0 0.0
    %156 = vmatprep.subr.mxu0 0.0
    %157 = vmatpush2.msra.mxu0 0.0
    %158 = vmatprep.subr.mxu0 0.0
    %159 = vmatpush2.msra.mxu0 0.0
    %160 = vmatprep.subr.mxu0 0.0
    %161 = vmatpush2.msra.mxu0 0.0
    %162 = vmatprep.subr.mxu0 0.0
    %163 = vmatpush2.msra.mxu0 0.0
    %164 = vmatprep.subr.mxu0 0.0
    %165 = vmatpush2.msra.mxu0 0.0
    %166 = vmatprep.subr.mxu0 0.0
    %167 = vmatpush2.msra.mxu0 0.0
    %168 = vmatprep.subr.mxu0 0.0
    %169 = vmatpush2.msra.mxu0 0.0
    %170 = vmatprep.subr.mxu0 0.0
    %171 = vmatpush2.msra.mxu0 0.0
    %172 = vmatprep.subr.mxu0 0.0
    %173 = vmatpush2.msra.mxu0 0.0
    %174 = vmatprep.subr.mxu0 0.0
    %175 = vmatpush2.msra.mxu0 0.0
    %176 = vmatprep.subr.mxu0 0.0
    %177 = vmatpush2.msra.mxu0 0.0
    %178 = vmatprep.mubr.f32.mxu0 0.0
    %179 = vmatmul.mubr.f32.gmra.mxu0 %v109
    %v180 = vpop.f32.mrf.mxu0
    %v181 = vadd.f32 %v106, %v180
    %v182 = vpop.f32.mrf.mxu0
    %183 = vmatprep.mubr.f32.mxu0 0.0
    %184 = vmatmul.mubr.f32.gmra.mxu0 %v112
    %v185 = vpop.f32.mrf.mxu0
    %v186 = vadd.f32 %v106, %v185
    %v187 = vpop.f32.mrf.mxu0
    %188 = vdwg.mxu0
    %vm189 = vcmask 785408
    %190 = vst.msk [vmem:[#allocation7] sm:$0xff] %vm189, %v181
    %191 = vst.msk [vmem:[#allocation7 + $0x8] sm:$0xff] %vm189, %v186
    // Predicated region
    $region30: #{tpu_custom_call.1} parent=1 // pred_check
      _
    $region31: #{tpu_custom_call.1} parent=1 // pred_check_branch
      %193 = sbr.rel (0) target = $region33
    $region32: #{tpu_custom_call.1} parent=1 // pred_region
      %s195 = ssub.s32 256, 256
      %196 = vsyncadd [#allocation4], %s195
      %s197 = sshll.u32 [#allocation7], 4
      %s198 = int_to_ptr.vmem [resolvable:$true] %s197
      %203 = dma.vmem_to_hbm [thread:$0]  %s198, 256, %s5, [#allocation4], 128, 128, 8
    $region33: #{tpu_custom_call.1} parent=1 // pred_fallthru
      _
    // Predicated region
    $region34: #{tpu_custom_call.1} parent=1 // pred_check
      _
    $region35: #{tpu_custom_call.1} parent=1 // pred_check_branch
      %205 = sbr.rel (0) target = $region37
    $region36: #{tpu_custom_call.1} parent=1 // pred_region
      %206 = dma.done [#allocation4], 256
    $region37: #{tpu_custom_call.1} parent=1 // pred_fallthru
      _
    %207 = vsyncpa [#allocation3], 1
    %208 = vsyncpa [#allocation6], 1
    %209 = vsyncpa [#allocation4], 1

</llo_original>
